<compile_context>
chip_gen: v6e
topology: v6e:2x2x1
jax: 0.10.0
libtpu: 0.0.40
codegen_flags: <defaults>
</compile_context>

<pallas_src>
import functools

import numpy as np
import jax
import jax.numpy as jnp
from jax import lax
from jax.experimental import pallas as pl
from jax.experimental.pallas import tpu as pltpu


def _clog(x):
    # PyTorch BCELoss clamps each log term at -100.
    return jnp.maximum(jnp.log(x), -100.0)


def _sobel_mag(x, H, W):
    """Zero-padded 3x3 Sobel cross-correlation magnitude of x: [bt, H, W].

    Shifted neighbours come from pltpu.roll (+ boundary masks) instead of
    slicing a padded slab, so no unaligned-slice VMEM copies are materialized.
    """
    rows = lax.broadcasted_iota(jnp.int32, x.shape, 1)
    cols = lax.broadcasted_iota(jnp.int32, x.shape, 2)

    def sh_rows(a, d):  # y[b, i, j] = a[b, i + d, j], zero outside
        r = pltpu.roll(a, (-d) % H, axis=1)
        return jnp.where((rows + d >= 0) & (rows + d < H), r, 0.0)

    def sh_cols(a, d):  # y[b, i, j] = a[b, i, j + d], zero outside
        r = pltpu.roll(a, (-d) % W, axis=2)
        return jnp.where((cols + d >= 0) & (cols + d < W), r, 0.0)

    up = sh_rows(x, -1)
    dn = sh_rows(x, +1)
    ul = sh_cols(up, -1)
    ur = sh_cols(up, +1)
    dl = sh_cols(dn, -1)
    dr = sh_cols(dn, +1)
    cl = sh_cols(x, -1)
    cr = sh_cols(x, +1)

    gx = (ur - ul) + 2.0 * (cr - cl) + (dr - dl)
    gy = (dl + 2.0 * dn + dr) - (ul + 2.0 * up + ur)
    return jnp.sqrt(gx * gx + gy * gy + 1e-6)


def _write_row(out_ref, vals):
    """Write scalars into lanes 0..len-1 of the lane-dense (1,1,128) out block."""
    lane = lax.broadcasted_iota(jnp.int32, (1, 128), 1)
    row = jnp.zeros((1, 128), jnp.float32)
    for k, v in enumerate(vals):
        row = jnp.where(lane == k, v, row)
    out_ref[0] = row


def _pass1_kernel(pred_ref, target_ref, out_ref, *, H, W):
    """Per-sample partial reductions (BCE/Dice/Jaccard sums + Sobel min/max)."""
    p = pred_ref[...]          # (1, H, W)
    t = target_ref[...]

    bce_sum = jnp.sum(-(t * _clog(p) + (1.0 - t) * _clog(1.0 - p)))
    inter = jnp.sum(p * t)
    s_p = jnp.sum(p)
    s_t = jnp.sum(t)           # doubles as the per-sample target sum -> label

    pe = _sobel_mag(p, H, W)
    te = _sobel_mag(t, H, W)

    _write_row(out_ref, [bce_sum, inter, s_p, s_t,
                         jnp.min(pe), jnp.max(pe), jnp.min(te), jnp.max(te)])


def _pass2_kernel(stats_ref, labels_ref, pred_ref, target_ref, feat_ref,
                  out_ref, *, B, H, W):
    """Edge BCE with global min/max (SMEM scalars) + LPCL via group sums."""
    p = pred_ref[...]          # (1, H, W)
    t = target_ref[...]

    pe = _sobel_mag(p, H, W)
    te = _sobel_mag(t, H, W)
    pe_min = stats_ref[0]
    pe_inv = 1.0 / (stats_ref[1] - pe_min + 1e-6)
    te_min = stats_ref[2]
    te_inv = 1.0 / (stats_ref[3] - te_min + 1e-6)
    # clip is a numerical no-op here; guards the re-computed Sobel against
    # sub-ulp drift past the pass-1 extrema.
    pe_n = jnp.clip((pe - pe_min) * pe_inv, 0.0, 1.0)
    te_n = jnp.clip((te - te_min) * te_inv, 0.0, 1.0)
    edge_sum = jnp.sum(-(te_n * _clog(pe_n) + (1.0 - te_n) * _clog(1.0 - pe_n)))

    # ---- LPCL via per-label group sums (no BxB matmul, no MXU) ----
    # (recomputed per grid step; B*F is tiny and the feature block is constant)
    f = feat_ref[...]                                   # (B, F)
    lbl = labels_ref[...]                               # (B, 1) of {0,1}
    sumsq = jnp.sum(f * f, axis=1, keepdims=True)       # (B, 1)
    fn = f * lax.rsqrt(jnp.maximum(sumsq, 1e-24))       # == f / max(||f||,1e-12)
    g1 = jnp.sum(fn * lbl, axis=0, keepdims=True)       # (1, F)
    g0 = jnp.sum(fn * (1.0 - lbl), axis=0, keepdims=True)
    pos_sum = jnp.sum(g1 * g1) + jnp.sum(g0 * g0)       # = sum(sim * mask)
    tot = g1 + g0
    neg_sum = jnp.sum(tot * tot) - pos_sum              # = sum(sim * (1-mask))
    n1 = jnp.sum(lbl)
    n0 = float(B) - n1
    num_pos = n1 * n1 + n0 * n0 - float(B)
    num_neg = 2.0 * n1 * n0
    pos_loss = jnp.where(num_pos > 0.0, -pos_sum / jnp.maximum(num_pos, 1.0), 0.0)
    neg_loss = jnp.where(num_neg > 0.0, neg_sum / jnp.maximum(num_neg, 1.0), 0.0)
    lpcl = pos_loss + neg_loss

    _write_row(out_ref, [edge_sum, lpcl])


def hybrid_loss(pred, target, features):
    """pred, target: [B, 1, H, W] (NCHW); features: [B, Cf, Hf, Wf] -> scalar."""
    B, C, H, W = pred.shape
    assert C == 1, "Sobel conv in the reference expects a single channel"
    p = pred[:, 0].astype(jnp.float32)
    t = target[:, 0].astype(jnp.float32)
    f = features.reshape(B, -1).astype(jnp.float32)
    F_ = f.shape[1]
    n_px = B * H * W

    spatial_spec = pl.BlockSpec((1, H, W), lambda b: (b, 0, 0))
    row_spec = pl.BlockSpec((1, 1, 128), lambda b: (b, 0, 0))
    parallel = pltpu.CompilerParams(dimension_semantics=("parallel",))

    # ---- pass 1: per-sample partial reductions + Sobel min/max ----
    part1 = pl.pallas_call(
        functools.partial(_pass1_kernel, H=H, W=W),
        grid=(B,),
        in_specs=[spatial_spec, spatial_spec],
        out_specs=row_spec,
        out_shape=jax.ShapeDtypeStruct((B, 1, 128), jnp.float32),
        compiler_params=parallel,
        cost_estimate=pl.CostEstimate(
            flops=110 * n_px, transcendentals=4 * n_px,
            bytes_accessed=2 * 4 * n_px + 4 * B * 128),
    )(p, t)[:, 0, :]

    bce_sum = jnp.sum(part1[:, 0])
    inter = jnp.sum(part1[:, 1])
    s_p = jnp.sum(part1[:, 2])
    st_per = part1[:, 3]
    s_t = jnp.sum(st_per)
    stats = jnp.stack([jnp.min(part1[:, 4]), jnp.max(part1[:, 5]),
                       jnp.min(part1[:, 6]), jnp.max(part1[:, 7])])
    labels = (st_per * (1.0 / (H * W)) > 0.5).astype(jnp.float32).reshape(B, 1)

    # ---- pass 2: edge BCE with global min/max + LPCL ----
    part2 = pl.pallas_call(
        functools.partial(_pass2_kernel, B=B, H=H, W=W),
        grid=(B,),
        in_specs=[
            pl.BlockSpec(memory_space=pltpu.MemorySpace.SMEM),   # global stats
            pl.BlockSpec((B, 1), lambda b: (0, 0)),              # labels
            spatial_spec,                                        # pred
            spatial_spec,                                        # target
            pl.BlockSpec((B, F_), lambda b: (0, 0)),             # features
        ],
        out_specs=row_spec,
        out_shape=jax.ShapeDtypeStruct((B, 1, 128), jnp.float32),
        compiler_params=parallel,
        cost_estimate=pl.CostEstimate(
            flops=120 * n_px + 12 * B * F_, transcendentals=4 * n_px,
            bytes_accessed=(2 * n_px + B * F_) * 4 + 4 * B * 128),
    )(stats, labels, p, t, f)[:, 0, :]

    edge_sum = jnp.sum(part2[:, 0])
    lpcl = part2[0, 1]

    # ---- final scalar combine (a handful of numbers; plain JAX) ----
    smooth = 1.0
    bce = bce_sum / n_px
    dice = 1.0 - (2.0 * inter + smooth) / (s_p + s_t + smooth)
    jaccard = 1.0 - (inter + smooth) / (s_p + s_t - inter + smooth)
    edge = 0.5 * (edge_sum / n_px)   # EdgeAwareLoss(edge_weight=0.5)
    return bce + 1.0 * dice + 0.2 * jaccard + 0.3 * lpcl + edge


# --------------------------- pure-JAX reference ---------------------------

def _sobel_mag_ref(pad, H, W):
    gx = (-pad[:, 0:H, 0:W] + pad[:, 0:H, 2:W + 2]
          - 2.0 * pad[:, 1:H + 1, 0:W] + 2.0 * pad[:, 1:H + 1, 2:W + 2]
          - pad[:, 2:H + 2, 0:W] + pad[:, 2:H + 2, 2:W + 2])
    gy = (-pad[:, 0:H, 0:W] - 2.0 * pad[:, 0:H, 1:W + 1] - pad[:, 0:H, 2:W + 2]
          + pad[:, 2:H + 2, 0:W] + 2.0 * pad[:, 2:H + 2, 1:W + 1]
          + pad[:, 2:H + 2, 2:W + 2])
    return jnp.sqrt(gx * gx + gy * gy + 1e-6)


def hybrid_loss_ref(pred, target, features):
    """Pure-JAX reference (same math as the PyTorch module)."""
    B, C, H, W = pred.shape
    p = pred[:, 0].astype(jnp.float32)
    t = target[:, 0].astype(jnp.float32)
    P = jnp.pad(p, ((0, 0), (1, 1), (1, 1)))
    T = jnp.pad(t, ((0, 0), (1, 1), (1, 1)))

    bce = jnp.mean(-(t * _clog(p) + (1 - t) * _clog(1 - p)))
    inter = jnp.sum(p * t); sp = jnp.sum(p); st = jnp.sum(t)
    dice = 1.0 - (2 * inter + 1.0) / (sp + st + 1.0)
    jac = 1.0 - (inter + 1.0) / (sp + st - inter + 1.0)

    pe = _sobel_mag_ref(P, H, W); te = _sobel_mag_ref(T, H, W)
    pe_n = (pe - pe.min()) / (pe.max() - pe.min() + 1e-6)
    te_n = (te - te.min()) / (te.max() - te.min() + 1e-6)
    edge = 0.5 * jnp.mean(-(te_n * _clog(pe_n) + (1 - te_n) * _clog(1 - pe_n)))

    f = features.reshape(B, -1).astype(jnp.float32)
    f = f / jnp.maximum(jnp.linalg.norm(f, axis=1, keepdims=True), 1e-12)
    lbl = (t.reshape(B, -1).mean(axis=1) > 0.5).astype(jnp.float32)
    mask = (lbl[:, None] == lbl[None, :]).astype(jnp.float32)
    sim = f @ f.T
    num_pos = mask.sum() - B
    num_neg = (1 - mask).sum()
    pos_loss = jnp.where(num_pos > 0, -(sim * mask).sum() / jnp.maximum(num_pos, 1.0), 0.0)
    neg_loss = jnp.where(num_neg > 0, (sim * (1 - mask)).sum() / jnp.maximum(num_neg, 1.0), 0.0)
    lpcl = pos_loss + neg_loss

    return bce + 1.0 * dice + 0.2 * jac + 0.3 * lpcl + edge


if __name__ == "__main__":
    key = jax.random.PRNGKey(0)
    k1, k2, k3 = jax.random.split(key, 3)
    # W = 128 keeps the last (lane) dim dense (perf review: lane-dense layout);
    # the wrapper/kernels are shape-generic.
    B, H, W = 2, 16, 128
    Cf, Hf, Wf = 8, 16, 16

    pred = jax.nn.sigmoid(jax.random.normal(k1, (B, 1, H, W), jnp.float32))
    target = (jax.random.uniform(k2, (B, 1, H, W)) > 0.5).astype(jnp.float32)
    features = jax.random.normal(k3, (B, Cf, Hf, Wf), jnp.float32)

    loss = jax.block_until_ready(hybrid_loss(pred, target, features))
    ref = jax.block_until_ready(hybrid_loss_ref(pred, target, features))

    assert np.isfinite(float(loss)), "non-finite loss"
    np.testing.assert_allclose(float(loss), float(ref), rtol=2e-3, atol=2e-3)

    print("KERNEL_OK")
</pallas_src>

<mosaic_0001>
module attributes {stable_mosaic.version = 11 : i64} {
  func.func @_pass1_kernel(%arg0: i32, %arg1: memref<1x16x128xf32, #tpu.memory_space<vmem>>, %arg2: memref<1x16x128xf32, #tpu.memory_space<vmem>>, %arg3: memref<1x1x128xf32, #tpu.memory_space<vmem>>) attributes {dimension_semantics = [#tpu.dimension_semantics<parallel>], iteration_bounds = array<i64: 2>, scalar_prefetch = 0 : i64, scratch_operands = 0 : i64, tpu.core_type = #tpu.core_type<tc>, window_params = [{transform_indices = @transform_0, window_bounds = array<i64: 1, 16, 128>}, {transform_indices = @transform_1, window_bounds = array<i64: 1, 16, 128>}, {transform_indices = @transform_2, window_bounds = array<i64: 1, 1, 128>}]} {
    %c0 = arith.constant 0 : index
    %c0_0 = arith.constant 0 : index
    %c0_1 = arith.constant 0 : index
    %0 = vector.load %arg1[%c0, %c0_0, %c0_1] : memref<1x16x128xf32, #tpu.memory_space<vmem>>, vector<1x16x128xf32>
    %c0_2 = arith.constant 0 : index
    %c0_3 = arith.constant 0 : index
    %c0_4 = arith.constant 0 : index
    %1 = vector.load %arg2[%c0_2, %c0_3, %c0_4] : memref<1x16x128xf32, #tpu.memory_space<vmem>>, vector<1x16x128xf32>
    %2 = math.log %0 : vector<1x16x128xf32>
    %cst = arith.constant -1.000000e+02 : f32
    %3 = vector.broadcast %cst : f32 to vector<1x16x128xf32>
    %4 = arith.maximumf %2, %3 : vector<1x16x128xf32>
    %5 = arith.mulf %1, %4 : vector<1x16x128xf32>
    %cst_5 = arith.constant 1.000000e+00 : f32
    %6 = vector.broadcast %cst_5 : f32 to vector<1x16x128xf32>
    %7 = arith.subf %6, %1 : vector<1x16x128xf32>
    %cst_6 = arith.constant 1.000000e+00 : f32
    %8 = vector.broadcast %cst_6 : f32 to vector<1x16x128xf32>
    %9 = arith.subf %8, %0 : vector<1x16x128xf32>
    %10 = math.log %9 : vector<1x16x128xf32>
    %cst_7 = arith.constant -1.000000e+02 : f32
    %11 = vector.broadcast %cst_7 : f32 to vector<1x16x128xf32>
    %12 = arith.maximumf %10, %11 : vector<1x16x128xf32>
    %13 = arith.mulf %7, %12 : vector<1x16x128xf32>
    %14 = arith.addf %5, %13 : vector<1x16x128xf32>
    %cst_8 = arith.constant 0.000000e+00 : f32
    %15 = vector.broadcast %cst_8 : f32 to vector<1x16x128xf32>
    %16 = arith.subf %15, %14 : vector<1x16x128xf32>
    %17 = vector.shape_cast %16 : vector<1x16x128xf32> to vector<1x1x16x128xf32>
    %cst_9 = arith.constant dense<0.000000e+00> : vector<1xf32>
    %18 = vector.multi_reduction <add>, %17, %cst_9 [1, 2, 3] : vector<1x1x16x128xf32> to vector<1xf32>
    %19 = vector.shape_cast %18 : vector<1xf32> to vector<1x1x1x1xf32>
    %20 = vector.extract %19[0, 0, 0, 0] : f32 from vector<1x1x1x1xf32>
    %21 = arith.mulf %0, %1 : vector<1x16x128xf32>
    %22 = vector.shape_cast %21 : vector<1x16x128xf32> to vector<1x1x16x128xf32>
    %cst_10 = arith.constant dense<0.000000e+00> : vector<1xf32>
    %23 = vector.multi_reduction <add>, %22, %cst_10 [1, 2, 3] : vector<1x1x16x128xf32> to vector<1xf32>
    %24 = vector.shape_cast %23 : vector<1xf32> to vector<1x1x1x1xf32>
    %25 = vector.extract %24[0, 0, 0, 0] : f32 from vector<1x1x1x1xf32>
    %26 = vector.shape_cast %0 : vector<1x16x128xf32> to vector<1x1x16x128xf32>
    %cst_11 = arith.constant dense<0.000000e+00> : vector<1xf32>
    %27 = vector.multi_reduction <add>, %26, %cst_11 [1, 2, 3] : vector<1x1x16x128xf32> to vector<1xf32>
    %28 = vector.shape_cast %27 : vector<1xf32> to vector<1x1x1x1xf32>
    %29 = vector.extract %28[0, 0, 0, 0] : f32 from vector<1x1x1x1xf32>
    %30 = vector.shape_cast %1 : vector<1x16x128xf32> to vector<1x1x16x128xf32>
    %cst_12 = arith.constant dense<0.000000e+00> : vector<1xf32>
    %31 = vector.multi_reduction <add>, %30, %cst_12 [1, 2, 3] : vector<1x1x16x128xf32> to vector<1xf32>
    %32 = vector.shape_cast %31 : vector<1xf32> to vector<1x1x1x1xf32>
    %33 = vector.extract %32[0, 0, 0, 0] : f32 from vector<1x1x1x1xf32>
    %34 = tpu.iota {dimensions = array<i32: 1>} : vector<1x16x128xi32>
    %35 = tpu.iota {dimensions = array<i32: 2>} : vector<1x16x128xi32>
    %c1_i32 = arith.constant 1 : i32
    %36 = tpu.dynamic_rotate %0 by %c1_i32 dim 1 : vector<1x16x128xf32>, i32 -> vector<1x16x128xf32>
    %c-1_i32 = arith.constant -1 : i32
    %37 = vector.broadcast %c-1_i32 : i32 to vector<1x16x128xi32>
    %38 = arith.addi %34, %37 : vector<1x16x128xi32>
    %c0_i32 = arith.constant 0 : i32
    %39 = vector.broadcast %c0_i32 : i32 to vector<1x16x128xi32>
    %40 = arith.cmpi sge, %38, %39 : vector<1x16x128xi32>
    %c-1_i32_13 = arith.constant -1 : i32
    %41 = vector.broadcast %c-1_i32_13 : i32 to vector<1x16x128xi32>
    %42 = arith.addi %34, %41 : vector<1x16x128xi32>
    %c16_i32 = arith.constant 16 : i32
    %43 = vector.broadcast %c16_i32 : i32 to vector<1x16x128xi32>
    %44 = arith.cmpi slt, %42, %43 : vector<1x16x128xi32>
    %45 = arith.andi %40, %44 : vector<1x16x128xi1>
    %cst_14 = arith.constant 0.000000e+00 : f32
    %46 = vector.broadcast %cst_14 : f32 to vector<1x16x128xf32>
    %47 = arith.select %45, %36, %46 : vector<1x16x128xi1>, vector<1x16x128xf32>
    %c15_i32 = arith.constant 15 : i32
    %48 = tpu.dynamic_rotate %0 by %c15_i32 dim 1 : vector<1x16x128xf32>, i32 -> vector<1x16x128xf32>
    %c1_i32_15 = arith.constant 1 : i32
    %49 = vector.broadcast %c1_i32_15 : i32 to vector<1x16x128xi32>
    %50 = arith.addi %34, %49 : vector<1x16x128xi32>
    %c0_i32_16 = arith.constant 0 : i32
    %51 = vector.broadcast %c0_i32_16 : i32 to vector<1x16x128xi32>
    %52 = arith.cmpi sge, %50, %51 : vector<1x16x128xi32>
    %c1_i32_17 = arith.constant 1 : i32
    %53 = vector.broadcast %c1_i32_17 : i32 to vector<1x16x128xi32>
    %54 = arith.addi %34, %53 : vector<1x16x128xi32>
    %c16_i32_18 = arith.constant 16 : i32
    %55 = vector.broadcast %c16_i32_18 : i32 to vector<1x16x128xi32>
    %56 = arith.cmpi slt, %54, %55 : vector<1x16x128xi32>
    %57 = arith.andi %52, %56 : vector<1x16x128xi1>
    %cst_19 = arith.constant 0.000000e+00 : f32
    %58 = vector.broadcast %cst_19 : f32 to vector<1x16x128xf32>
    %59 = arith.select %57, %48, %58 : vector<1x16x128xi1>, vector<1x16x128xf32>
    %c1_i32_20 = arith.constant 1 : i32
    %60 = tpu.dynamic_rotate %47 by %c1_i32_20 dim 2 : vector<1x16x128xf32>, i32 -> vector<1x16x128xf32>
    %c-1_i32_21 = arith.constant -1 : i32
    %61 = vector.broadcast %c-1_i32_21 : i32 to vector<1x16x128xi32>
    %62 = arith.addi %35, %61 : vector<1x16x128xi32>
    %c0_i32_22 = arith.constant 0 : i32
    %63 = vector.broadcast %c0_i32_22 : i32 to vector<1x16x128xi32>
    %64 = arith.cmpi sge, %62, %63 : vector<1x16x128xi32>
    %c-1_i32_23 = arith.constant -1 : i32
    %65 = vector.broadcast %c-1_i32_23 : i32 to vector<1x16x128xi32>
    %66 = arith.addi %35, %65 : vector<1x16x128xi32>
    %c128_i32 = arith.constant 128 : i32
    %67 = vector.broadcast %c128_i32 : i32 to vector<1x16x128xi32>
    %68 = arith.cmpi slt, %66, %67 : vector<1x16x128xi32>
    %69 = arith.andi %64, %68 : vector<1x16x128xi1>
    %cst_24 = arith.constant 0.000000e+00 : f32
    %70 = vector.broadcast %cst_24 : f32 to vector<1x16x128xf32>
    %71 = arith.select %69, %60, %70 : vector<1x16x128xi1>, vector<1x16x128xf32>
    %c127_i32 = arith.constant 127 : i32
    %72 = tpu.dynamic_rotate %47 by %c127_i32 dim 2 : vector<1x16x128xf32>, i32 -> vector<1x16x128xf32>
    %c1_i32_25 = arith.constant 1 : i32
    %73 = vector.broadcast %c1_i32_25 : i32 to vector<1x16x128xi32>
    %74 = arith.addi %35, %73 : vector<1x16x128xi32>
    %c0_i32_26 = arith.constant 0 : i32
    %75 = vector.broadcast %c0_i32_26 : i32 to vector<1x16x128xi32>
    %76 = arith.cmpi sge, %74, %75 : vector<1x16x128xi32>
    %c1_i32_27 = arith.constant 1 : i32
    %77 = vector.broadcast %c1_i32_27 : i32 to vector<1x16x128xi32>
    %78 = arith.addi %35, %77 : vector<1x16x128xi32>
    %c128_i32_28 = arith.constant 128 : i32
    %79 = vector.broadcast %c128_i32_28 : i32 to vector<1x16x128xi32>
    %80 = arith.cmpi slt, %78, %79 : vector<1x16x128xi32>
    %81 = arith.andi %76, %80 : vector<1x16x128xi1>
    %cst_29 = arith.constant 0.000000e+00 : f32
    %82 = vector.broadcast %cst_29 : f32 to vector<1x16x128xf32>
    %83 = arith.select %81, %72, %82 : vector<1x16x128xi1>, vector<1x16x128xf32>
    %c1_i32_30 = arith.constant 1 : i32
    %84 = tpu.dynamic_rotate %59 by %c1_i32_30 dim 2 : vector<1x16x128xf32>, i32 -> vector<1x16x128xf32>
    %c-1_i32_31 = arith.constant -1 : i32
    %85 = vector.broadcast %c-1_i32_31 : i32 to vector<1x16x128xi32>
    %86 = arith.addi %35, %85 : vector<1x16x128xi32>
    %c0_i32_32 = arith.constant 0 : i32
    %87 = vector.broadcast %c0_i32_32 : i32 to vector<1x16x128xi32>
    %88 = arith.cmpi sge, %86, %87 : vector<1x16x128xi32>
    %c-1_i32_33 = arith.constant -1 : i32
    %89 = vector.broadcast %c-1_i32_33 : i32 to vector<1x16x128xi32>
    %90 = arith.addi %35, %89 : vector<1x16x128xi32>
    %c128_i32_34 = arith.constant 128 : i32
    %91 = vector.broadcast %c128_i32_34 : i32 to vector<1x16x128xi32>
    %92 = arith.cmpi slt, %90, %91 : vector<1x16x128xi32>
    %93 = arith.andi %88, %92 : vector<1x16x128xi1>
    %cst_35 = arith.constant 0.000000e+00 : f32
    %94 = vector.broadcast %cst_35 : f32 to vector<1x16x128xf32>
    %95 = arith.select %93, %84, %94 : vector<1x16x128xi1>, vector<1x16x128xf32>
    %c127_i32_36 = arith.constant 127 : i32
    %96 = tpu.dynamic_rotate %59 by %c127_i32_36 dim 2 : vector<1x16x128xf32>, i32 -> vector<1x16x128xf32>
    %c1_i32_37 = arith.constant 1 : i32
    %97 = vector.broadcast %c1_i32_37 : i32 to vector<1x16x128xi32>
    %98 = arith.addi %35, %97 : vector<1x16x128xi32>
    %c0_i32_38 = arith.constant 0 : i32
    %99 = vector.broadcast %c0_i32_38 : i32 to vector<1x16x128xi32>
    %100 = arith.cmpi sge, %98, %99 : vector<1x16x128xi32>
    %c1_i32_39 = arith.constant 1 : i32
    %101 = vector.broadcast %c1_i32_39 : i32 to vector<1x16x128xi32>
    %102 = arith.addi %35, %101 : vector<1x16x128xi32>
    %c128_i32_40 = arith.constant 128 : i32
    %103 = vector.broadcast %c128_i32_40 : i32 to vector<1x16x128xi32>
    %104 = arith.cmpi slt, %102, %103 : vector<1x16x128xi32>
    %105 = arith.andi %100, %104 : vector<1x16x128xi1>
    %cst_41 = arith.constant 0.000000e+00 : f32
    %106 = vector.broadcast %cst_41 : f32 to vector<1x16x128xf32>
    %107 = arith.select %105, %96, %106 : vector<1x16x128xi1>, vector<1x16x128xf32>
    %c1_i32_42 = arith.constant 1 : i32
    %108 = tpu.dynamic_rotate %0 by %c1_i32_42 dim 2 : vector<1x16x128xf32>, i32 -> vector<1x16x128xf32>
    %c-1_i32_43 = arith.constant -1 : i32
    %109 = vector.broadcast %c-1_i32_43 : i32 to vector<1x16x128xi32>
    %110 = arith.addi %35, %109 : vector<1x16x128xi32>
    %c0_i32_44 = arith.constant 0 : i32
    %111 = vector.broadcast %c0_i32_44 : i32 to vector<1x16x128xi32>
    %112 = arith.cmpi sge, %110, %111 : vector<1x16x128xi32>
    %c-1_i32_45 = arith.constant -1 : i32
    %113 = vector.broadcast %c-1_i32_45 : i32 to vector<1x16x128xi32>
    %114 = arith.addi %35, %113 : vector<1x16x128xi32>
    %c128_i32_46 = arith.constant 128 : i32
    %115 = vector.broadcast %c128_i32_46 : i32 to vector<1x16x128xi32>
    %116 = arith.cmpi slt, %114, %115 : vector<1x16x128xi32>
    %117 = arith.andi %112, %116 : vector<1x16x128xi1>
    %cst_47 = arith.constant 0.000000e+00 : f32
    %118 = vector.broadcast %cst_47 : f32 to vector<1x16x128xf32>
    %119 = arith.select %117, %108, %118 : vector<1x16x128xi1>, vector<1x16x128xf32>
    %c127_i32_48 = arith.constant 127 : i32
    %120 = tpu.dynamic_rotate %0 by %c127_i32_48 dim 2 : vector<1x16x128xf32>, i32 -> vector<1x16x128xf32>
    %c1_i32_49 = arith.constant 1 : i32
    %121 = vector.broadcast %c1_i32_49 : i32 to vector<1x16x128xi32>
    %122 = arith.addi %35, %121 : vector<1x16x128xi32>
    %c0_i32_50 = arith.constant 0 : i32
    %123 = vector.broadcast %c0_i32_50 : i32 to vector<1x16x128xi32>
    %124 = arith.cmpi sge, %122, %123 : vector<1x16x128xi32>
    %c1_i32_51 = arith.constant 1 : i32
    %125 = vector.broadcast %c1_i32_51 : i32 to vector<1x16x128xi32>
    %126 = arith.addi %35, %125 : vector<1x16x128xi32>
    %c128_i32_52 = arith.constant 128 : i32
    %127 = vector.broadcast %c128_i32_52 : i32 to vector<1x16x128xi32>
    %128 = arith.cmpi slt, %126, %127 : vector<1x16x128xi32>
    %129 = arith.andi %124, %128 : vector<1x16x128xi1>
    %cst_53 = arith.constant 0.000000e+00 : f32
    %130 = vector.broadcast %cst_53 : f32 to vector<1x16x128xf32>
    %131 = arith.select %129, %120, %130 : vector<1x16x128xi1>, vector<1x16x128xf32>
    %132 = arith.subf %83, %71 : vector<1x16x128xf32>
    %133 = arith.subf %131, %119 : vector<1x16x128xf32>
    %cst_54 = arith.constant 2.000000e+00 : f32
    %134 = vector.broadcast %cst_54 : f32 to vector<1x16x128xf32>
    %135 = arith.mulf %134, %133 : vector<1x16x128xf32>
    %136 = arith.addf %132, %135 : vector<1x16x128xf32>
    %137 = arith.subf %107, %95 : vector<1x16x128xf32>
    %138 = arith.addf %136, %137 : vector<1x16x128xf32>
    %cst_55 = arith.constant 2.000000e+00 : f32
    %139 = vector.broadcast %cst_55 : f32 to vector<1x16x128xf32>
    %140 = arith.mulf %139, %59 : vector<1x16x128xf32>
    %141 = arith.addf %95, %140 : vector<1x16x128xf32>
    %142 = arith.addf %141, %107 : vector<1x16x128xf32>
    %cst_56 = arith.constant 2.000000e+00 : f32
    %143 = vector.broadcast %cst_56 : f32 to vector<1x16x128xf32>
    %144 = arith.mulf %143, %47 : vector<1x16x128xf32>
    %145 = arith.addf %71, %144 : vector<1x16x128xf32>
    %146 = arith.addf %145, %83 : vector<1x16x128xf32>
    %147 = arith.subf %142, %146 : vector<1x16x128xf32>
    %148 = arith.mulf %138, %138 : vector<1x16x128xf32>
    %149 = arith.mulf %147, %147 : vector<1x16x128xf32>
    %150 = arith.addf %148, %149 : vector<1x16x128xf32>
    %cst_57 = arith.constant 9.99999997E-7 : f32
    %151 = vector.broadcast %cst_57 : f32 to vector<1x16x128xf32>
    %152 = arith.addf %150, %151 : vector<1x16x128xf32>
    %153 = math.sqrt %152 : vector<1x16x128xf32>
    %154 = tpu.iota {dimensions = array<i32: 1>} : vector<1x16x128xi32>
    %155 = tpu.iota {dimensions = array<i32: 2>} : vector<1x16x128xi32>
    %c1_i32_58 = arith.constant 1 : i32
    %156 = tpu.dynamic_rotate %1 by %c1_i32_58 dim 1 : vector<1x16x128xf32>, i32 -> vector<1x16x128xf32>
    %c-1_i32_59 = arith.constant -1 : i32
    %157 = vector.broadcast %c-1_i32_59 : i32 to vector<1x16x128xi32>
    %158 = arith.addi %154, %157 : vector<1x16x128xi32>
    %c0_i32_60 = arith.constant 0 : i32
    %159 = vector.broadcast %c0_i32_60 : i32 to vector<1x16x128xi32>
    %160 = arith.cmpi sge, %158, %159 : vector<1x16x128xi32>
    %c-1_i32_61 = arith.constant -1 : i32
    %161 = vector.broadcast %c-1_i32_61 : i32 to vector<1x16x128xi32>
    %162 = arith.addi %154, %161 : vector<1x16x128xi32>
    %c16_i32_62 = arith.constant 16 : i32
    %163 = vector.broadcast %c16_i32_62 : i32 to vector<1x16x128xi32>
    %164 = arith.cmpi slt, %162, %163 : vector<1x16x128xi32>
    %165 = arith.andi %160, %164 : vector<1x16x128xi1>
    %cst_63 = arith.constant 0.000000e+00 : f32
    %166 = vector.broadcast %cst_63 : f32 to vector<1x16x128xf32>
    %167 = arith.select %165, %156, %166 : vector<1x16x128xi1>, vector<1x16x128xf32>
    %c15_i32_64 = arith.constant 15 : i32
    %168 = tpu.dynamic_rotate %1 by %c15_i32_64 dim 1 : vector<1x16x128xf32>, i32 -> vector<1x16x128xf32>
    %c1_i32_65 = arith.constant 1 : i32
    %169 = vector.broadcast %c1_i32_65 : i32 to vector<1x16x128xi32>
    %170 = arith.addi %154, %169 : vector<1x16x128xi32>
    %c0_i32_66 = arith.constant 0 : i32
    %171 = vector.broadcast %c0_i32_66 : i32 to vector<1x16x128xi32>
    %172 = arith.cmpi sge, %170, %171 : vector<1x16x128xi32>
    %c1_i32_67 = arith.constant 1 : i32
    %173 = vector.broadcast %c1_i32_67 : i32 to vector<1x16x128xi32>
    %174 = arith.addi %154, %173 : vector<1x16x128xi32>
    %c16_i32_68 = arith.constant 16 : i32
    %175 = vector.broadcast %c16_i32_68 : i32 to vector<1x16x128xi32>
    %176 = arith.cmpi slt, %174, %175 : vector<1x16x128xi32>
    %177 = arith.andi %172, %176 : vector<1x16x128xi1>
    %cst_69 = arith.constant 0.000000e+00 : f32
    %178 = vector.broadcast %cst_69 : f32 to vector<1x16x128xf32>
    %179 = arith.select %177, %168, %178 : vector<1x16x128xi1>, vector<1x16x128xf32>
    %c1_i32_70 = arith.constant 1 : i32
    %180 = tpu.dynamic_rotate %167 by %c1_i32_70 dim 2 : vector<1x16x128xf32>, i32 -> vector<1x16x128xf32>
    %c-1_i32_71 = arith.constant -1 : i32
    %181 = vector.broadcast %c-1_i32_71 : i32 to vector<1x16x128xi32>
    %182 = arith.addi %155, %181 : vector<1x16x128xi32>
    %c0_i32_72 = arith.constant 0 : i32
    %183 = vector.broadcast %c0_i32_72 : i32 to vector<1x16x128xi32>
    %184 = arith.cmpi sge, %182, %183 : vector<1x16x128xi32>
    %c-1_i32_73 = arith.constant -1 : i32
    %185 = vector.broadcast %c-1_i32_73 : i32 to vector<1x16x128xi32>
    %186 = arith.addi %155, %185 : vector<1x16x128xi32>
    %c128_i32_74 = arith.constant 128 : i32
    %187 = vector.broadcast %c128_i32_74 : i32 to vector<1x16x128xi32>
    %188 = arith.cmpi slt, %186, %187 : vector<1x16x128xi32>
    %189 = arith.andi %184, %188 : vector<1x16x128xi1>
    %cst_75 = arith.constant 0.000000e+00 : f32
    %190 = vector.broadcast %cst_75 : f32 to vector<1x16x128xf32>
    %191 = arith.select %189, %180, %190 : vector<1x16x128xi1>, vector<1x16x128xf32>
    %c127_i32_76 = arith.constant 127 : i32
    %192 = tpu.dynamic_rotate %167 by %c127_i32_76 dim 2 : vector<1x16x128xf32>, i32 -> vector<1x16x128xf32>
    %c1_i32_77 = arith.constant 1 : i32
    %193 = vector.broadcast %c1_i32_77 : i32 to vector<1x16x128xi32>
    %194 = arith.addi %155, %193 : vector<1x16x128xi32>
    %c0_i32_78 = arith.constant 0 : i32
    %195 = vector.broadcast %c0_i32_78 : i32 to vector<1x16x128xi32>
    %196 = arith.cmpi sge, %194, %195 : vector<1x16x128xi32>
    %c1_i32_79 = arith.constant 1 : i32
    %197 = vector.broadcast %c1_i32_79 : i32 to vector<1x16x128xi32>
    %198 = arith.addi %155, %197 : vector<1x16x128xi32>
    %c128_i32_80 = arith.constant 128 : i32
    %199 = vector.broadcast %c128_i32_80 : i32 to vector<1x16x128xi32>
    %200 = arith.cmpi slt, %198, %199 : vector<1x16x128xi32>
    %201 = arith.andi %196, %200 : vector<1x16x128xi1>
    %cst_81 = arith.constant 0.000000e+00 : f32
    %202 = vector.broadcast %cst_81 : f32 to vector<1x16x128xf32>
    %203 = arith.select %201, %192, %202 : vector<1x16x128xi1>, vector<1x16x128xf32>
    %c1_i32_82 = arith.constant 1 : i32
    %204 = tpu.dynamic_rotate %179 by %c1_i32_82 dim 2 : vector<1x16x128xf32>, i32 -> vector<1x16x128xf32>
    %c-1_i32_83 = arith.constant -1 : i32
    %205 = vector.broadcast %c-1_i32_83 : i32 to vector<1x16x128xi32>
    %206 = arith.addi %155, %205 : vector<1x16x128xi32>
    %c0_i32_84 = arith.constant 0 : i32
    %207 = vector.broadcast %c0_i32_84 : i32 to vector<1x16x128xi32>
    %208 = arith.cmpi sge, %206, %207 : vector<1x16x128xi32>
    %c-1_i32_85 = arith.constant -1 : i32
    %209 = vector.broadcast %c-1_i32_85 : i32 to vector<1x16x128xi32>
    %210 = arith.addi %155, %209 : vector<1x16x128xi32>
    %c128_i32_86 = arith.constant 128 : i32
    %211 = vector.broadcast %c128_i32_86 : i32 to vector<1x16x128xi32>
    %212 = arith.cmpi slt, %210, %211 : vector<1x16x128xi32>
    %213 = arith.andi %208, %212 : vector<1x16x128xi1>
    %cst_87 = arith.constant 0.000000e+00 : f32
    %214 = vector.broadcast %cst_87 : f32 to vector<1x16x128xf32>
    %215 = arith.select %213, %204, %214 : vector<1x16x128xi1>, vector<1x16x128xf32>
    %c127_i32_88 = arith.constant 127 : i32
    %216 = tpu.dynamic_rotate %179 by %c127_i32_88 dim 2 : vector<1x16x128xf32>, i32 -> vector<1x16x128xf32>
    %c1_i32_89 = arith.constant 1 : i32
    %217 = vector.broadcast %c1_i32_89 : i32 to vector<1x16x128xi32>
    %218 = arith.addi %155, %217 : vector<1x16x128xi32>
    %c0_i32_90 = arith.constant 0 : i32
    %219 = vector.broadcast %c0_i32_90 : i32 to vector<1x16x128xi32>
    %220 = arith.cmpi sge, %218, %219 : vector<1x16x128xi32>
    %c1_i32_91 = arith.constant 1 : i32
    %221 = vector.broadcast %c1_i32_91 : i32 to vector<1x16x128xi32>
    %222 = arith.addi %155, %221 : vector<1x16x128xi32>
    %c128_i32_92 = arith.constant 128 : i32
    %223 = vector.broadcast %c128_i32_92 : i32 to vector<1x16x128xi32>
    %224 = arith.cmpi slt, %222, %223 : vector<1x16x128xi32>
    %225 = arith.andi %220, %224 : vector<1x16x128xi1>
    %cst_93 = arith.constant 0.000000e+00 : f32
    %226 = vector.broadcast %cst_93 : f32 to vector<1x16x128xf32>
    %227 = arith.select %225, %216, %226 : vector<1x16x128xi1>, vector<1x16x128xf32>
    %c1_i32_94 = arith.constant 1 : i32
    %228 = tpu.dynamic_rotate %1 by %c1_i32_94 dim 2 : vector<1x16x128xf32>, i32 -> vector<1x16x128xf32>
    %c-1_i32_95 = arith.constant -1 : i32
    %229 = vector.broadcast %c-1_i32_95 : i32 to vector<1x16x128xi32>
    %230 = arith.addi %155, %229 : vector<1x16x128xi32>
    %c0_i32_96 = arith.constant 0 : i32
    %231 = vector.broadcast %c0_i32_96 : i32 to vector<1x16x128xi32>
    %232 = arith.cmpi sge, %230, %231 : vector<1x16x128xi32>
    %c-1_i32_97 = arith.constant -1 : i32
    %233 = vector.broadcast %c-1_i32_97 : i32 to vector<1x16x128xi32>
    %234 = arith.addi %155, %233 : vector<1x16x128xi32>
    %c128_i32_98 = arith.constant 128 : i32
    %235 = vector.broadcast %c128_i32_98 : i32 to vector<1x16x128xi32>
    %236 = arith.cmpi slt, %234, %235 : vector<1x16x128xi32>
    %237 = arith.andi %232, %236 : vector<1x16x128xi1>
    %cst_99 = arith.constant 0.000000e+00 : f32
    %238 = vector.broadcast %cst_99 : f32 to vector<1x16x128xf32>
    %239 = arith.select %237, %228, %238 : vector<1x16x128xi1>, vector<1x16x128xf32>
    %c127_i32_100 = arith.constant 127 : i32
    %240 = tpu.dynamic_rotate %1 by %c127_i32_100 dim 2 : vector<1x16x128xf32>, i32 -> vector<1x16x128xf32>
    %c1_i32_101 = arith.constant 1 : i32
    %241 = vector.broadcast %c1_i32_101 : i32 to vector<1x16x128xi32>
    %242 = arith.addi %155, %241 : vector<1x16x128xi32>
    %c0_i32_102 = arith.constant 0 : i32
    %243 = vector.broadcast %c0_i32_102 : i32 to vector<1x16x128xi32>
    %244 = arith.cmpi sge, %242, %243 : vector<1x16x128xi32>
    %c1_i32_103 = arith.constant 1 : i32
    %245 = vector.broadcast %c1_i32_103 : i32 to vector<1x16x128xi32>
    %246 = arith.addi %155, %245 : vector<1x16x128xi32>
    %c128_i32_104 = arith.constant 128 : i32
    %247 = vector.broadcast %c128_i32_104 : i32 to vector<1x16x128xi32>
    %248 = arith.cmpi slt, %246, %247 : vector<1x16x128xi32>
    %249 = arith.andi %244, %248 : vector<1x16x128xi1>
    %cst_105 = arith.constant 0.000000e+00 : f32
    %250 = vector.broadcast %cst_105 : f32 to vector<1x16x128xf32>
    %251 = arith.select %249, %240, %250 : vector<1x16x128xi1>, vector<1x16x128xf32>
    %252 = arith.subf %203, %191 : vector<1x16x128xf32>
    %253 = arith.subf %251, %239 : vector<1x16x128xf32>
    %cst_106 = arith.constant 2.000000e+00 : f32
    %254 = vector.broadcast %cst_106 : f32 to vector<1x16x128xf32>
    %255 = arith.mulf %254, %253 : vector<1x16x128xf32>
    %256 = arith.addf %252, %255 : vector<1x16x128xf32>
    %257 = arith.subf %227, %215 : vector<1x16x128xf32>
    %258 = arith.addf %256, %257 : vector<1x16x128xf32>
    %cst_107 = arith.constant 2.000000e+00 : f32
    %259 = vector.broadcast %cst_107 : f32 to vector<1x16x128xf32>
    %260 = arith.mulf %259, %179 : vector<1x16x128xf32>
    %261 = arith.addf %215, %260 : vector<1x16x128xf32>
    %262 = arith.addf %261, %227 : vector<1x16x128xf32>
    %cst_108 = arith.constant 2.000000e+00 : f32
    %263 = vector.broadcast %cst_108 : f32 to vector<1x16x128xf32>
    %264 = arith.mulf %263, %167 : vector<1x16x128xf32>
    %265 = arith.addf %191, %264 : vector<1x16x128xf32>
    %266 = arith.addf %265, %203 : vector<1x16x128xf32>
    %267 = arith.subf %262, %266 : vector<1x16x128xf32>
    %268 = arith.mulf %258, %258 : vector<1x16x128xf32>
    %269 = arith.mulf %267, %267 : vector<1x16x128xf32>
    %270 = arith.addf %268, %269 : vector<1x16x128xf32>
    %cst_109 = arith.constant 9.99999997E-7 : f32
    %271 = vector.broadcast %cst_109 : f32 to vector<1x16x128xf32>
    %272 = arith.addf %270, %271 : vector<1x16x128xf32>
    %273 = math.sqrt %272 : vector<1x16x128xf32>
    %274 = vector.shape_cast %153 : vector<1x16x128xf32> to vector<1x1x16x128xf32>
    %cst_110 = arith.constant dense<0x7F800000> : vector<1xf32>
    %275 = vector.multi_reduction <minimumf>, %274, %cst_110 [1, 2, 3] : vector<1x1x16x128xf32> to vector<1xf32>
    %276 = vector.shape_cast %275 : vector<1xf32> to vector<1x1x1x1xf32>
    %277 = vector.extract %276[0, 0, 0, 0] : f32 from vector<1x1x1x1xf32>
    %278 = vector.shape_cast %153 : vector<1x16x128xf32> to vector<1x1x16x128xf32>
    %cst_111 = arith.constant dense<0xFF800000> : vector<1xf32>
    %279 = vector.multi_reduction <maximumf>, %278, %cst_111 [1, 2, 3] : vector<1x1x16x128xf32> to vector<1xf32>
    %280 = vector.shape_cast %279 : vector<1xf32> to vector<1x1x1x1xf32>
    %281 = vector.extract %280[0, 0, 0, 0] : f32 from vector<1x1x1x1xf32>
    %282 = vector.shape_cast %273 : vector<1x16x128xf32> to vector<1x1x16x128xf32>
    %cst_112 = arith.constant dense<0x7F800000> : vector<1xf32>
    %283 = vector.multi_reduction <minimumf>, %282, %cst_112 [1, 2, 3] : vector<1x1x16x128xf32> to vector<1xf32>
    %284 = vector.shape_cast %283 : vector<1xf32> to vector<1x1x1x1xf32>
    %285 = vector.extract %284[0, 0, 0, 0] : f32 from vector<1x1x1x1xf32>
    %286 = vector.shape_cast %273 : vector<1x16x128xf32> to vector<1x1x16x128xf32>
    %cst_113 = arith.constant dense<0xFF800000> : vector<1xf32>
    %287 = vector.multi_reduction <maximumf>, %286, %cst_113 [1, 2, 3] : vector<1x1x16x128xf32> to vector<1xf32>
    %288 = vector.shape_cast %287 : vector<1xf32> to vector<1x1x1x1xf32>
    %289 = vector.extract %288[0, 0, 0, 0] : f32 from vector<1x1x1x1xf32>
    %290 = tpu.iota {dimensions = array<i32: 1>} : vector<1x128xi32>
    %cst_114 = arith.constant 0.000000e+00 : f32
    %291 = vector.broadcast %cst_114 : f32 to vector<1x128xf32>
    %c0_i32_115 = arith.constant 0 : i32
    %292 = vector.broadcast %c0_i32_115 : i32 to vector<1x128xi32>
    %293 = arith.cmpi eq, %290, %292 : vector<1x128xi32>
    %294 = vector.broadcast %20 : f32 to vector<1x128xf32>
    %295 = arith.select %293, %294, %291 : vector<1x128xi1>, vector<1x128xf32>
    %c1_i32_116 = arith.constant 1 : i32
    %296 = vector.broadcast %c1_i32_116 : i32 to vector<1x128xi32>
    %297 = arith.cmpi eq, %290, %296 : vector<1x128xi32>
    %298 = vector.broadcast %25 : f32 to vector<1x128xf32>
    %299 = arith.select %297, %298, %295 : vector<1x128xi1>, vector<1x128xf32>
    %c2_i32 = arith.constant 2 : i32
    %300 = vector.broadcast %c2_i32 : i32 to vector<1x128xi32>
    %301 = arith.cmpi eq, %290, %300 : vector<1x128xi32>
    %302 = vector.broadcast %29 : f32 to vector<1x128xf32>
    %303 = arith.select %301, %302, %299 : vector<1x128xi1>, vector<1x128xf32>
    %c3_i32 = arith.constant 3 : i32
    %304 = vector.broadcast %c3_i32 : i32 to vector<1x128xi32>
    %305 = arith.cmpi eq, %290, %304 : vector<1x128xi32>
    %306 = vector.broadcast %33 : f32 to vector<1x128xf32>
    %307 = arith.select %305, %306, %303 : vector<1x128xi1>, vector<1x128xf32>
    %c4_i32 = arith.constant 4 : i32
    %308 = vector.broadcast %c4_i32 : i32 to vector<1x128xi32>
    %309 = arith.cmpi eq, %290, %308 : vector<1x128xi32>
    %310 = vector.broadcast %277 : f32 to vector<1x128xf32>
    %311 = arith.select %309, %310, %307 : vector<1x128xi1>, vector<1x128xf32>
    %c5_i32 = arith.constant 5 : i32
    %312 = vector.broadcast %c5_i32 : i32 to vector<1x128xi32>
    %313 = arith.cmpi eq, %290, %312 : vector<1x128xi32>
    %314 = vector.broadcast %281 : f32 to vector<1x128xf32>
    %315 = arith.select %313, %314, %311 : vector<1x128xi1>, vector<1x128xf32>
    %c6_i32 = arith.constant 6 : i32
    %316 = vector.broadcast %c6_i32 : i32 to vector<1x128xi32>
    %317 = arith.cmpi eq, %290, %316 : vector<1x128xi32>
    %318 = vector.broadcast %285 : f32 to vector<1x128xf32>
    %319 = arith.select %317, %318, %315 : vector<1x128xi1>, vector<1x128xf32>
    %c7_i32 = arith.constant 7 : i32
    %320 = vector.broadcast %c7_i32 : i32 to vector<1x128xi32>
    %321 = arith.cmpi eq, %290, %320 : vector<1x128xi32>
    %322 = vector.broadcast %289 : f32 to vector<1x128xf32>
    %323 = arith.select %321, %322, %319 : vector<1x128xi1>, vector<1x128xf32>
    %c0_117 = arith.constant 0 : index
    %c0_118 = arith.constant 0 : index
    %c0_119 = arith.constant 0 : index
    %324 = vector.load %arg3[%c0_117, %c0_118, %c0_119] : memref<1x1x128xf32, #tpu.memory_space<vmem>>, vector<1x1x128xf32>
    %325 = vector.shape_cast %324 : vector<1x1x128xf32> to vector<1x128xf32>
    %326 = vector.shape_cast %323 : vector<1x128xf32> to vector<1x1x128xf32>
    tpu.vector_store %arg3[%c0_117, %c0_118, %c0_119], %326 {strides = array<i32>} : memref<1x1x128xf32, #tpu.memory_space<vmem>>, vector<1x1x128xf32>,
    return
  }
  func.func @transform_0(%arg0: i32) -> (i32, i32, i32) {
    %c0_i32 = arith.constant 0 : i32
    %c0_i32_0 = arith.constant 0 : i32
    %c0_i32_1 = arith.constant 0 : i32
    return %arg0, %c0_i32, %c0_i32_0 : i32, i32, i32
  }
  func.func @transform_1(%arg0: i32) -> (i32, i32, i32) {
    %c0_i32 = arith.constant 0 : i32
    %c0_i32_0 = arith.constant 0 : i32
    %c0_i32_1 = arith.constant 0 : i32
    return %arg0, %c0_i32, %c0_i32_0 : i32, i32, i32
  }
  func.func @transform_2(%arg0: i32) -> (i32, i32, i32) {
    %c0_i32 = arith.constant 0 : i32
    %c0_i32_0 = arith.constant 0 : i32
    %c0_i32_1 = arith.constant 0 : i32
    return %arg0, %c0_i32, %c0_i32_0 : i32, i32, i32
  }
}

</mosaic_0001>

<llo_original>
// kernel: tpu_custom_call.1
$region0: #{tpu_custom_call.1}
  #allocation0 [shape = 'u32[]', space=smem, size = 0x4, offset = 0x4, fixed_abs, tag = 'smem constant byte address 0x4 - core index']
  #allocation1 [shape = 'u32[144,128]{1,0:T(1,128)}', space=vmem, size = 0x12000, scoped, tag = 'internal scratch']
  %s0 = inlined_call_operand.hbm [shape: f32[2,16,128], index: 0, kind: input, shape index: {}]
  %s1 = inlined_call_operand.hbm [shape: f32[2,16,128], index: 1, kind: input, shape index: {}]
  %s2 = inlined_call_operand.hbm [shape: f32[2,1,128], index: 2, kind: output, shape index: {}]
  %s3 = sld [smem:[#allocation0]]
  $region49: #{tpu_custom_call.1} parent=0
    _
  %s5 = ssub.s32 1, %s3
  %s6 = scalar_select 0, %s5, %s3
  $region1: #{tpu_custom_call.1} parent=0
    #allocation2 [shape = 'u8[16384]{0}', space=vmem, size = 0x4000, scoped, tag = 'input window, operand 0']
    #allocation3 [shape = 's32[2]{0}', space=sflag, size = 0x8, scoped, tag = 'scoped memory for tpu_custom_call.1']
    #allocation4 [shape = 's32[2]{0}', space=sflag, size = 0x8, scoped, tag = 'scoped memory for tpu_custom_call.1']
    #allocation5 [shape = 'u8[16384]{0}', space=vmem, size = 0x4000, scoped, tag = 'input window, operand 1']
    #allocation6 [shape = 's32[2]{0}', space=sflag, size = 0x8, scoped, tag = 'scoped memory for tpu_custom_call.1']
    #allocation7 [shape = 'u8[1024]{0}', space=vmem, size = 0x400, scoped, tag = 'output window, operand 0']
    %7 = vsyncpa [#allocation3], 0
    %s8 = scalar_lea.sflag [#allocation3], 1
    %9 = vsyncpa %s8, 0
    %10 = vsyncpa [#allocation6], 0
    %s11 = scalar_lea.sflag [#allocation6], 1
    %12 = vsyncpa %s11, 0
    %13 = vsyncpa [#allocation4], 0
    %s14 = scalar_lea.sflag [#allocation4], 1
    %15 = vsyncpa %s14, 0
    loop: start=0, step=1, limit=4
    $region2: #{tpu_custom_call.1} parent=1 // loop_pre_header
      _
    $region3: #{tpu_custom_call.1} parent=1 // loop_header
      %s17 = sphi 0, %s21
      %p18 = scmp.ge.s32.totalorder %s17, 4
      %s27 = sphi 0, %s29
      %s30 = sphi 0, %s27
      %s31 = sphi 0, %s30
      %s47 = sphi 0, %s31
      %s53 = sphi 0, %s55
      %s56 = sphi 0, %s53
      %s57 = sphi 0, %s56
      %s73 = sphi 0, %s57
      %s79 = sphi 0, %s81
      %s82 = sphi 0, %s79
      %s83 = sphi 0, %s82
      %s99 = sphi 0, %s83
    $region4: #{tpu_custom_call.1} parent=1 // loop_header_branch
      %20 = sbr.rel (%p18) target = $region8
    $region5: #{tpu_custom_call.1} parent=1 // loop_body
      %s22 = ssub.s32 %s17, 1
      %s23 = ssub.s32 %s17, 2
      %s24 = sadd.s32 %s17, 1
      %s25 = ssub.s32 %s17, %s24
      %p26 = scmp.eq.s32.totalorder %s25, 0
      %s28 = sadd.s32 %s27, 1
      %s29 = scalar_select %p26, %s27, %s28
      %p32 = pneg %p26
      %p33 = scmp.eq.s32.totalorder %s17, 1
      %p34 = por %p32, %p33
      %p35 = scmp.ne.s32.totalorder %s27, %s30
      %p36 = scmp.eq.s32.totalorder %s17, 0
      %p37 = por %p35, %p36
      %p38 = scmp.ne.s32.totalorder %s27, %s30
      %p39 = scmp.eq.s32.totalorder %s22, 1
      %p40 = por %p38, %p39
      %p41 = scmp.ne.s32.totalorder %s30, %s31
      %p42 = scmp.eq.s32.totalorder %s22, 0
      %p43 = por %p41, %p42
      %p44 = scmp.ne.s32.totalorder %s30, %s31
      %p45 = scmp.eq.s32.totalorder %s23, 1
      %p46 = por %p44, %p45
      %p48 = scmp.ne.s32.totalorder %s31, %s47
      %p49 = scmp.eq.s32.totalorder %s23, 0
      %p50 = por %p48, %p49
      %s51 = ssub.s32 %s17, %s24
      %p52 = scmp.eq.s32.totalorder %s51, 0
      %s54 = sadd.s32 %s53, 1
      %s55 = scalar_select %p52, %s53, %s54
      %p58 = pneg %p52
      %p59 = scmp.eq.s32.totalorder %s17, 1
      %p60 = por %p58, %p59
      %p61 = scmp.ne.s32.totalorder %s53, %s56
      %p62 = scmp.eq.s32.totalorder %s17, 0
      %p63 = por %p61, %p62
      %p64 = scmp.ne.s32.totalorder %s53, %s56
      %p65 = scmp.eq.s32.totalorder %s22, 1
      %p66 = por %p64, %p65
      %p67 = scmp.ne.s32.totalorder %s56, %s57
      %p68 = scmp.eq.s32.totalorder %s22, 0
      %p69 = por %p67, %p68
      %p70 = scmp.ne.s32.totalorder %s56, %s57
      %p71 = scmp.eq.s32.totalorder %s23, 1
      %p72 = por %p70, %p71
      %p74 = scmp.ne.s32.totalorder %s57, %s73
      %p75 = scmp.eq.s32.totalorder %s23, 0
      %p76 = por %p74, %p75
      %s77 = ssub.s32 %s17, %s24
      %p78 = scmp.eq.s32.totalorder %s77, 0
      %s80 = sadd.s32 %s79, 1
      %s81 = scalar_select %p78, %s79, %s80
      %p84 = pneg %p78
      %p85 = scmp.eq.s32.totalorder %s17, 1
      %p86 = por %p84, %p85
      %p87 = scmp.ne.s32.totalorder %s79, %s82
      %p88 = scmp.eq.s32.totalorder %s17, 0
      %p89 = por %p87, %p88
      %p90 = scmp.ne.s32.totalorder %s79, %s82
      %p91 = scmp.eq.s32.totalorder %s22, 1
      %p92 = por %p90, %p91
      %p93 = scmp.ne.s32.totalorder %s82, %s83
      %p94 = scmp.eq.s32.totalorder %s22, 0
      %p95 = por %p93, %p94
      %p96 = scmp.ne.s32.totalorder %s82, %s83
      %p97 = scmp.eq.s32.totalorder %s23, 1
      %p98 = por %p96, %p97
      %p100 = scmp.ne.s32.totalorder %s83, %s99
      %p101 = scmp.eq.s32.totalorder %s23, 0
      %p102 = por %p100, %p101
      %p103 = scmp.le.s32.totalorder 1, %s17
      %p104 = scmp.lt.s32.totalorder %s17, 3
      %p105 = pnand %p103, %p104
      %p106 = pneg %p105
      // Predicated region
      $region9: #{tpu_custom_call.1} parent=5 // pred_check
        _
      $region10: #{tpu_custom_call.1} parent=5 // pred_check_branch
        %108 = sbr.rel (%p105) target = $region12
      $region11: #{tpu_custom_call.1} parent=5 // pred_region
        %s109 = ssub.s32 %s17, 1
      $region12: #{tpu_custom_call.1} parent=5 // pred_fallthru
        _
      %p110 = scmp.lt.s32.totalorder %s17, 2
      // Predicated region
      $region13: #{tpu_custom_call.1} parent=5 // pred_check
        %p111 = pneg %p110
      $region14: #{tpu_custom_call.1} parent=5 // pred_check_branch
        %113 = sbr.rel (%p111) target = $region16
      $region15: #{tpu_custom_call.1} parent=5 // pred_region
        // Predicated region
        $region17: #{tpu_custom_call.1} parent=15 // pred_check
          %p114 = pneg %p37
        $region18: #{tpu_custom_call.1} parent=15 // pred_check_branch
          %116 = sbr.rel (%p114) target = $region20
        $region19: #{tpu_custom_call.1} parent=15 // pred_region
          %s117 = sand.u32 %s27, 1
          %s118 = scalar_lea.sflag [#allocation3], %s117
          %s119 = sand.u32 %s27, 1
          %s120 = smul.addr %s119, 16
          %s121 = scalar_lea.vmem [#allocation2], %s120
          %s123 = ssub.s32 256, 256
          %124 = vsyncadd %s118, %s123
          %s125 = smul.addr %s17, 2
          %s126 = smul.addr %s125, 128
          %s127 = scalar_lea.hbm %s0, %s126
          %s128 = sshll.u32 %s121, 4
          %s129 = int_to_ptr.vmem [resolvable:$true] %s128
          %134 = dma.hbm_to_vmem [thread:$0]  %s127, 256, %s129, %s118, 128, 128, 8
        $region20: #{tpu_custom_call.1} parent=15 // pred_fallthru
          _
        // Predicated region
        $region21: #{tpu_custom_call.1} parent=15 // pred_check
          %p135 = pneg %p63
        $region22: #{tpu_custom_call.1} parent=15 // pred_check_branch
          %137 = sbr.rel (%p135) target = $region24
        $region23: #{tpu_custom_call.1} parent=15 // pred_region
          %s138 = sand.u32 %s53, 1
          %s139 = scalar_lea.sflag [#allocation6], %s138
          %s140 = sand.u32 %s53, 1
          %s141 = smul.addr %s140, 16
          %s142 = scalar_lea.vmem [#allocation5], %s141
          %s144 = ssub.s32 256, 256
          %145 = vsyncadd %s139, %s144
          %s146 = smul.addr %s17, 2
          %s147 = smul.addr %s146, 128
          %s148 = scalar_lea.hbm %s1, %s147
          %s149 = sshll.u32 %s142, 4
          %s150 = int_to_ptr.vmem [resolvable:$true] %s149
          %155 = dma.hbm_to_vmem [thread:$0]  %s148, 256, %s150, %s139, 128, 128, 8
        $region24: #{tpu_custom_call.1} parent=15 // pred_fallthru
          _
      $region16: #{tpu_custom_call.1} parent=5 // pred_fallthru
        _
      %p156 = scmp.le.s32.totalorder 1, %s17
      %p157 = scmp.lt.s32.totalorder %s17, 3
      %p158 = pnand %p156, %p157
      %p159 = pneg %p158
      // Predicated region
      $region25: #{tpu_custom_call.1} parent=5 // pred_check
        _
      $region26: #{tpu_custom_call.1} parent=5 // pred_check_branch
        %161 = sbr.rel (%p158) target = $region28
      $region27: #{tpu_custom_call.1} parent=5 // pred_region
        %s162 = ssub.s32 %s17, 1
        %s163 = sand.u32 %s30, 1
        %s164 = scalar_lea.sflag [#allocation3], %s163
        %s165 = sand.u32 %s30, 1
        %s166 = smul.addr %s165, 16
        %s167 = scalar_lea.vmem [#allocation2], %s166
        // Predicated region
        $region29: #{tpu_custom_call.1} parent=27 // pred_check
          %p168 = pneg %p43
        $region30: #{tpu_custom_call.1} parent=27 // pred_check_branch
          %170 = sbr.rel (%p168) target = $region32
        $region31: #{tpu_custom_call.1} parent=27 // pred_region
          %171 = dma.done %s164, 256
        $region32: #{tpu_custom_call.1} parent=27 // pred_fallthru
          _
        %s172 = sand.u32 %s56, 1
        %s173 = scalar_lea.sflag [#allocation6], %s172
        %s174 = sand.u32 %s56, 1
        %s175 = smul.addr %s174, 16
        %s176 = scalar_lea.vmem [#allocation5], %s175
        // Predicated region
        $region33: #{tpu_custom_call.1} parent=27 // pred_check
          %p177 = pneg %p69
        $region34: #{tpu_custom_call.1} parent=27 // pred_check_branch
          %179 = sbr.rel (%p177) target = $region36
        $region35: #{tpu_custom_call.1} parent=27 // pred_region
          %180 = dma.done %s173, 256
        $region36: #{tpu_custom_call.1} parent=27 // pred_fallthru
          _
        %s181 = sand.u32 %s30, 1
        %s182 = scalar_lea.sflag [#allocation3], %s181
        %s183 = sand.u32 %s30, 1
        %s184 = smul.addr %s183, 16
        %s185 = scalar_lea.vmem [#allocation2], %s184
        %p186 = pneg %p43
        %p187 = pneg %p40
        %s188 = sand.u32 %s56, 1
        %s189 = scalar_lea.sflag [#allocation6], %s188
        %s190 = sand.u32 %s56, 1
        %s191 = smul.addr %s190, 16
        %s192 = scalar_lea.vmem [#allocation5], %s191
        %p193 = pneg %p69
        %p194 = pneg %p66
        %p195 = pneg %p95
        %p196 = pneg %p92
        %s197 = sand.u32 %s82, 1
        %s198 = scalar_lea.sflag [#allocation4], %s197
        %s199 = sand.u32 %s82, 1
        %s200 = scalar_lea.vmem [#allocation7], %s199
        %v201 = vld [vmem:[%s167] sm:$0xff]
        %v202 = vld [vmem:[%s167 + $0x8] sm:$0xff]
        %v203 = vld [vmem:[%s176] sm:$0xff]
        %v204 = vld [vmem:[%s176 + $0x8] sm:$0xff]
        %v205 = vlog2.pop %v201
        %v206 = vmul.f32 %v205, 0.6931472
        %v207 = vlog2.pop %v202
        %v208 = vmul.f32 %v207, 0.6931472
        %v209 = vmax.f32 %v206, -100.0
        %v210 = vmax.f32 %v208, -100.0
        %v211 = vmul.f32 %v203, %v209
        %v212 = vmul.f32 %v204, %v210
        %v213 = vsub.f32 1.0, %v203
        %v214 = vsub.f32 1.0, %v204
        %v215 = vsub.f32 1.0, %v201
        %v216 = vsub.f32 1.0, %v202
        %v217 = vlog2.pop %v215
        %v218 = vmul.f32 %v217, 0.6931472
        %v219 = vlog2.pop %v216
        %v220 = vmul.f32 %v219, 0.6931472
        %v221 = vmax.f32 %v218, -100.0
        %v222 = vmax.f32 %v220, -100.0
        %v223 = vmul.f32 %v213, %v221
        %v224 = vmul.f32 %v214, %v222
        %v225 = vadd.f32 %v211, %v223
        %v226 = vadd.f32 %v212, %v224
        %v227 = vsub.f32 0.0, %v225
        %v228 = vsub.f32 0.0, %v226
        %v229 = vadd.f32 %v227, %v228
        %230 = vadd.xlane.f32.xlu0 %v229
        %v231 = vpop.xlane.xlu0 %230
        %v232 = vrot.slane %v231, 4
        %v233 = vadd.f32 %v231, %v232
        %v234 = vrot.slane %v233, 2
        %v235 = vadd.f32 %v233, %v234
        %v236 = vrot.slane %v235, 1
        %v237 = vadd.f32 %v235, %v236
        %s238 = vtos %v237
        %v239 = vmul.f32 %v201, %v203
        %v240 = vmul.f32 %v202, %v204
        %v241 = vadd.f32 %v239, %v240
        %242 = vadd.xlane.f32.xlu0 %v241
        %v243 = vpop.xlane.xlu0 %242
        %v244 = vrot.slane %v243, 4
        %v245 = vadd.f32 %v243, %v244
        %v246 = vrot.slane %v245, 2
        %v247 = vadd.f32 %v245, %v246
        %v248 = vrot.slane %v247, 1
        %v249 = vadd.f32 %v247, %v248
        %s250 = vtos %v249
        %v251 = vadd.f32 %v201, %v202
        %252 = vadd.xlane.f32.xlu0 %v251
        %v253 = vpop.xlane.xlu0 %252
        %v254 = vrot.slane %v253, 4
        %v255 = vadd.f32 %v253, %v254
        %v256 = vrot.slane %v255, 2
        %v257 = vadd.f32 %v255, %v256
        %v258 = vrot.slane %v257, 1
        %v259 = vadd.f32 %v257, %v258
        %s260 = vtos %v259
        %v261 = vadd.f32 %v203, %v204
        %262 = vadd.xlane.f32.xlu0 %v261
        %v263 = vpop.xlane.xlu0 %262
        %v264 = vrot.slane %v263, 4
        %v265 = vadd.f32 %v263, %v264
        %v266 = vrot.slane %v265, 2
        %v267 = vadd.f32 %v265, %v266
        %v268 = vrot.slane %v267, 1
        %v269 = vadd.f32 %v267, %v268
        %s270 = vtos %v269
        %v271 = vlaneseq
        %v272 = vshrl.u32 %v271, 7
        %v273 = vadd.s32 %v272, 8
        %v274 = vlaneseq
        %v275 = vand.u32 %v274, 127
        %v276 = vrot.slane %v201, 7
        %v277 = vrot.slane %v202, 7
        %vm278 = vcmp.lt.s32.totalorder %v272, 1
        %v279 = vsel %vm278, %v276, %v277
        %v280 = vsel %vm278, %v277, %v276
        %v281 = vadd.s32 %v272, 4294967295
        %v282 = vadd.s32 %v273, 4294967295
        %vm283 = vcmp.ge.s32.totalorder %v281, 0
        %vm284 = vcmp.ge.s32.totalorder %v282, 0
        %vm285 = vcmp.lt.s32.totalorder %v281, 16
        %vm286 = vcmp.lt.s32.totalorder %v282, 16
        %vm287 = vmand %vm283, %vm285
        %vm288 = vmand %vm284, %vm286
        %v289 = vsel %vm287, %v280, 0.0
        %v290 = vsel %vm288, %v279, 0.0
        %v291 = vrot.slane %v201, 1
        %v292 = vrot.slane %v202, 1
        %vm293 = vcmp.lt.s32.totalorder %v272, 7
        %v294 = vsel %vm293, %v291, %v292
        %v295 = vsel %vm293, %v292, %v291
        %v296 = vadd.s32 %v272, 1
        %v297 = vadd.s32 %v273, 1
        %vm298 = vcmp.ge.s32.totalorder %v296, 0
        %vm299 = vcmp.ge.s32.totalorder %v297, 0
        %vm300 = vcmp.lt.s32.totalorder %v296, 16
        %vm301 = vcmp.lt.s32.totalorder %v297, 16
        %vm302 = vmand %vm298, %vm300
        %vm303 = vmand %vm299, %vm301
        %v304 = vsel %vm302, %v294, 0.0
        %v305 = vsel %vm303, %v295, 0.0
        %306 = vrot.lane.b32.xlu0 %v289, 1
        %v307 = vpop.permute.xlu0 %306
        %308 = vrot.lane.b32.xlu0 %v290, 1
        %v309 = vpop.permute.xlu0 %308
        %v310 = vadd.s32 %v275, 4294967295
        %vm311 = vcmp.ge.s32.totalorder %v310, 0
        %vm312 = vcmp.lt.s32.totalorder %v310, 128
        %vm313 = vmand %vm311, %vm312
        %v314 = vsel %vm313, %v307, 0.0
        %v315 = vsel %vm313, %v309, 0.0
        %316 = vrot.lane.b32.xlu0 %v289, 127
        %v317 = vpop.permute.xlu0 %316
        %318 = vrot.lane.b32.xlu0 %v290, 127
        %v319 = vpop.permute.xlu0 %318
        %v320 = vadd.s32 %v275, 1
        %vm321 = vcmp.ge.s32.totalorder %v320, 0
        %vm322 = vcmp.lt.s32.totalorder %v320, 128
        %vm323 = vmand %vm321, %vm322
        %v324 = vsel %vm323, %v317, 0.0
        %v325 = vsel %vm323, %v319, 0.0
        %326 = vrot.lane.b32.xlu0 %v304, 1
        %v327 = vpop.permute.xlu0 %326
        %328 = vrot.lane.b32.xlu0 %v305, 1
        %v329 = vpop.permute.xlu0 %328
        %v330 = vsel %vm313, %v327, 0.0
        %v331 = vsel %vm313, %v329, 0.0
        %332 = vrot.lane.b32.xlu0 %v304, 127
        %v333 = vpop.permute.xlu0 %332
        %334 = vrot.lane.b32.xlu0 %v305, 127
        %v335 = vpop.permute.xlu0 %334
        %v336 = vsel %vm323, %v333, 0.0
        %v337 = vsel %vm323, %v335, 0.0
        %338 = vrot.lane.b32.xlu0 %v201, 1
        %v339 = vpop.permute.xlu0 %338
        %340 = vrot.lane.b32.xlu0 %v202, 1
        %v341 = vpop.permute.xlu0 %340
        %v342 = vsel %vm313, %v339, 0.0
        %v343 = vsel %vm313, %v341, 0.0
        %344 = vrot.lane.b32.xlu0 %v201, 127
        %v345 = vpop.permute.xlu0 %344
        %346 = vrot.lane.b32.xlu0 %v202, 127
        %v347 = vpop.permute.xlu0 %346
        %v348 = vsel %vm323, %v345, 0.0
        %v349 = vsel %vm323, %v347, 0.0
        %v350 = vsub.f32 %v324, %v314
        %v351 = vsub.f32 %v325, %v315
        %v352 = vsub.f32 %v348, %v342
        %v353 = vsub.f32 %v349, %v343
        %v354 = vmul.f32 %v352, 2.0
        %v355 = vmul.f32 %v353, 2.0
        %v356 = vadd.f32 %v350, %v354
        %v357 = vadd.f32 %v351, %v355
        %v358 = vsub.f32 %v336, %v330
        %v359 = vsub.f32 %v337, %v331
        %v360 = vadd.f32 %v356, %v358
        %v361 = vadd.f32 %v357, %v359
        %v362 = vmul.f32 %v304, 2.0
        %v363 = vmul.f32 %v305, 2.0
        %v364 = vadd.f32 %v330, %v362
        %v365 = vadd.f32 %v331, %v363
        %v366 = vadd.f32 %v364, %v336
        %v367 = vadd.f32 %v365, %v337
        %v368 = vmul.f32 %v289, 2.0
        %v369 = vmul.f32 %v290, 2.0
        %v370 = vadd.f32 %v314, %v368
        %v371 = vadd.f32 %v315, %v369
        %v372 = vadd.f32 %v370, %v324
        %v373 = vadd.f32 %v371, %v325
        %v374 = vsub.f32 %v366, %v372
        %v375 = vsub.f32 %v367, %v373
        %v376 = vmul.f32 %v360, %v360
        %v377 = vmul.f32 %v361, %v361
        %v378 = vmul.f32 %v374, %v374
        %v379 = vmul.f32 %v375, %v375
        %v380 = vadd.f32 %v376, %v378
        %v381 = vadd.f32 %v377, %v379
        %v382 = vadd.f32 %v380, 1e-06
        %v383 = vadd.f32 %v381, 1e-06
        %v384 = vrsqrt.pop %v382
        %v385 = vmul.f32 %v382, %v384
        %vm386 = vcmp.eq.f32.partialorder %v382, inf
        %v387 = vsel %vm386, %v382, %v385
        %vm388 = vcmp.eq.f32.partialorder %v382, 0.0
        %v389 = vand.u32 %v382, 2147483648
        %v390 = vsel %vm388, %v389, %v387
        %v391 = vrsqrt.pop %v383
        %v392 = vmul.f32 %v383, %v391
        %vm393 = vcmp.eq.f32.partialorder %v383, inf
        %v394 = vsel %vm393, %v383, %v392
        %vm395 = vcmp.eq.f32.partialorder %v383, 0.0
        %v396 = vand.u32 %v383, 2147483648
        %v397 = vsel %vm395, %v396, %v394
        %v398 = vrot.slane %v203, 7
        %v399 = vrot.slane %v204, 7
        %v400 = vsel %vm278, %v398, %v399
        %v401 = vsel %vm278, %v399, %v398
        %v402 = vsel %vm287, %v401, 0.0
        %v403 = vsel %vm288, %v400, 0.0
        %v404 = vrot.slane %v203, 1
        %v405 = vrot.slane %v204, 1
        %v406 = vsel %vm293, %v404, %v405
        %v407 = vsel %vm293, %v405, %v404
        %v408 = vsel %vm302, %v406, 0.0
        %v409 = vsel %vm303, %v407, 0.0
        %410 = vrot.lane.b32.xlu0 %v402, 1
        %v411 = vpop.permute.xlu0 %410
        %412 = vrot.lane.b32.xlu0 %v403, 1
        %v413 = vpop.permute.xlu0 %412
        %v414 = vsel %vm313, %v411, 0.0
        %v415 = vsel %vm313, %v413, 0.0
        %416 = vrot.lane.b32.xlu0 %v402, 127
        %v417 = vpop.permute.xlu0 %416
        %418 = vrot.lane.b32.xlu0 %v403, 127
        %v419 = vpop.permute.xlu0 %418
        %v420 = vsel %vm323, %v417, 0.0
        %v421 = vsel %vm323, %v419, 0.0
        %422 = vrot.lane.b32.xlu0 %v408, 1
        %v423 = vpop.permute.xlu0 %422
        %424 = vrot.lane.b32.xlu0 %v409, 1
        %v425 = vpop.permute.xlu0 %424
        %v426 = vsel %vm313, %v423, 0.0
        %v427 = vsel %vm313, %v425, 0.0
        %428 = vrot.lane.b32.xlu0 %v408, 127
        %v429 = vpop.permute.xlu0 %428
        %430 = vrot.lane.b32.xlu0 %v409, 127
        %v431 = vpop.permute.xlu0 %430
        %v432 = vsel %vm323, %v429, 0.0
        %v433 = vsel %vm323, %v431, 0.0
        %434 = vrot.lane.b32.xlu0 %v203, 1
        %v435 = vpop.permute.xlu0 %434
        %436 = vrot.lane.b32.xlu0 %v204, 1
        %v437 = vpop.permute.xlu0 %436
        %v438 = vsel %vm313, %v435, 0.0
        %v439 = vsel %vm313, %v437, 0.0
        %440 = vrot.lane.b32.xlu0 %v203, 127
        %v441 = vpop.permute.xlu0 %440
        %442 = vrot.lane.b32.xlu0 %v204, 127
        %v443 = vpop.permute.xlu0 %442
        %v444 = vsel %vm323, %v441, 0.0
        %v445 = vsel %vm323, %v443, 0.0
        %v446 = vsub.f32 %v420, %v414
        %v447 = vsub.f32 %v421, %v415
        %v448 = vsub.f32 %v444, %v438
        %v449 = vsub.f32 %v445, %v439
        %v450 = vmul.f32 %v448, 2.0
        %v451 = vmul.f32 %v449, 2.0
        %v452 = vadd.f32 %v446, %v450
        %v453 = vadd.f32 %v447, %v451
        %v454 = vsub.f32 %v432, %v426
        %v455 = vsub.f32 %v433, %v427
        %v456 = vadd.f32 %v452, %v454
        %v457 = vadd.f32 %v453, %v455
        %v458 = vmul.f32 %v408, 2.0
        %v459 = vmul.f32 %v409, 2.0
        %v460 = vadd.f32 %v426, %v458
        %v461 = vadd.f32 %v427, %v459
        %v462 = vadd.f32 %v460, %v432
        %v463 = vadd.f32 %v461, %v433
        %v464 = vmul.f32 %v402, 2.0
        %v465 = vmul.f32 %v403, 2.0
        %v466 = vadd.f32 %v414, %v464
        %v467 = vadd.f32 %v415, %v465
        %v468 = vadd.f32 %v466, %v420
        %v469 = vadd.f32 %v467, %v421
        %v470 = vsub.f32 %v462, %v468
        %v471 = vsub.f32 %v463, %v469
        %v472 = vmul.f32 %v456, %v456
        %v473 = vmul.f32 %v457, %v457
        %v474 = vmul.f32 %v470, %v470
        %v475 = vmul.f32 %v471, %v471
        %v476 = vadd.f32 %v472, %v474
        %v477 = vadd.f32 %v473, %v475
        %v478 = vadd.f32 %v476, 1e-06
        %v479 = vadd.f32 %v477, 1e-06
        %v480 = vrsqrt.pop %v478
        %v481 = vmul.f32 %v478, %v480
        %vm482 = vcmp.eq.f32.partialorder %v478, inf
        %v483 = vsel %vm482, %v478, %v481
        %vm484 = vcmp.eq.f32.partialorder %v478, 0.0
        %v485 = vand.u32 %v478, 2147483648
        %v486 = vsel %vm484, %v485, %v483
        %v487 = vrsqrt.pop %v479
        %v488 = vmul.f32 %v479, %v487
        %vm489 = vcmp.eq.f32.partialorder %v479, inf
        %v490 = vsel %vm489, %v479, %v488
        %vm491 = vcmp.eq.f32.partialorder %v479, 0.0
        %v492 = vand.u32 %v479, 2147483648
        %v493 = vsel %vm491, %v492, %v490
        %v494 = vmin.f32 %v390, %v397
        %495 = vmin.xlane.f32.xlu0 %v494
        %v496 = vpop.xlane.xlu0 %495
        %v497 = vrot.slane %v496, 4
        %v498 = vmin.f32 %v496, %v497
        %v499 = vrot.slane %v498, 2
        %v500 = vmin.f32 %v498, %v499
        %v501 = vrot.slane %v500, 1
        %v502 = vmin.f32 %v500, %v501
        %s503 = vtos %v502
        %v504 = vmax.f32 %v390, %v397
        %505 = vmax.xlane.f32.xlu0 %v504
        %v506 = vpop.xlane.xlu0 %505
        %v507 = vrot.slane %v506, 4
        %v508 = vmax.f32 %v506, %v507
        %v509 = vrot.slane %v508, 2
        %v510 = vmax.f32 %v508, %v509
        %v511 = vrot.slane %v510, 1
        %v512 = vmax.f32 %v510, %v511
        %s513 = vtos %v512
        %v514 = vmin.f32 %v486, %v493
        %515 = vmin.xlane.f32.xlu0 %v514
        %v516 = vpop.xlane.xlu0 %515
        %v517 = vrot.slane %v516, 4
        %v518 = vmin.f32 %v516, %v517
        %v519 = vrot.slane %v518, 2
        %v520 = vmin.f32 %v518, %v519
        %v521 = vrot.slane %v520, 1
        %v522 = vmin.f32 %v520, %v521
        %s523 = vtos %v522
        %v524 = vmax.f32 %v486, %v493
        %525 = vmax.xlane.f32.xlu0 %v524
        %v526 = vpop.xlane.xlu0 %525
        %v527 = vrot.slane %v526, 4
        %v528 = vmax.f32 %v526, %v527
        %v529 = vrot.slane %v528, 2
        %v530 = vmax.f32 %v528, %v529
        %v531 = vrot.slane %v530, 1
        %v532 = vmax.f32 %v530, %v531
        %s533 = vtos %v532
        %vm534 = vcmp.eq.s32.totalorder %v275, 0
        %v535 = vstv %s238
        %v536 = vsel %vm534, %v535, 0.0
        %vm537 = vcmp.eq.s32.totalorder %v275, 1
        %v538 = vstv %s250
        %v539 = vsel %vm537, %v538, %v536
        %vm540 = vcmp.eq.s32.totalorder %v275, 2
        %v541 = vstv %s260
        %v542 = vsel %vm540, %v541, %v539
        %vm543 = vcmp.eq.s32.totalorder %v275, 3
        %v544 = vstv %s270
        %v545 = vsel %vm543, %v544, %v542
        %vm546 = vcmp.eq.s32.totalorder %v275, 4
        %v547 = vstv %s503
        %v548 = vsel %vm546, %v547, %v545
        %vm549 = vcmp.eq.s32.totalorder %v275, 5
        %v550 = vstv %s513
        %v551 = vsel %vm549, %v550, %v548
        %vm552 = vcmp.eq.s32.totalorder %v275, 6
        %v553 = vstv %s523
        %v554 = vsel %vm552, %v553, %v551
        %vm555 = vcmp.eq.s32.totalorder %v275, 7
        %v556 = vstv %s533
        %v557 = vsel %vm555, %v556, %v554
        %558 = vst [vmem:[%s200] sm:$0x1] %v557
        %s559 = sand.u32 %s82, 1
        %s560 = scalar_lea.sflag [#allocation4], %s559
        %s561 = sand.u32 %s82, 1
        %s562 = scalar_lea.vmem [#allocation7], %s561
        // Predicated region
        $region37: #{tpu_custom_call.1} parent=27 // pred_check
          %p563 = pneg %p92
        $region38: #{tpu_custom_call.1} parent=27 // pred_check_branch
          %565 = sbr.rel (%p563) target = $region40
        $region39: #{tpu_custom_call.1} parent=27 // pred_region
          %s567 = ssub.s32 16, 16
          %568 = vsyncadd %s560, %s567
          %s569 = smul.addr %s22, 16
          %s570 = scalar_lea.hbm %s2, %s569
          %s572 = sshll.u32 %s562, 4
          %s573 = int_to_ptr.vmem [resolvable:$true] %s572
          %575 = dma.vmem_to_hbm [thread:$0]  %s573, 16, %s570, %s560
        $region40: #{tpu_custom_call.1} parent=27 // pred_fallthru
          _
      $region28: #{tpu_custom_call.1} parent=5 // pred_fallthru
        _
      %p576 = scmp.le.s32.totalorder 2, %s17
      // Predicated region
      $region41: #{tpu_custom_call.1} parent=5 // pred_check
        %p577 = pneg %p576
      $region42: #{tpu_custom_call.1} parent=5 // pred_check_branch
        %579 = sbr.rel (%p577) target = $region44
      $region43: #{tpu_custom_call.1} parent=5 // pred_region
        %s580 = ssub.s32 %s17, 2
        // Predicated region
        $region45: #{tpu_custom_call.1} parent=43 // pred_check
          %p581 = pneg %p98
        $region46: #{tpu_custom_call.1} parent=43 // pred_check_branch
          %583 = sbr.rel (%p581) target = $region48
        $region47: #{tpu_custom_call.1} parent=43 // pred_region
          %s584 = sand.u32 %s83, 1
          %s585 = scalar_lea.sflag [#allocation4], %s584
          %s586 = sand.u32 %s83, 1
          %s587 = scalar_lea.vmem [#allocation7], %s586
          %588 = dma.done %s585, 16
        $region48: #{tpu_custom_call.1} parent=43 // pred_fallthru
          _
      $region44: #{tpu_custom_call.1} parent=5 // pred_fallthru
        _
    $region6: #{tpu_custom_call.1} parent=1 // loop_footer
      %s21 = sadd.s32 1, %s17
    $region7: #{tpu_custom_call.1} parent=1 // loop_footer_branch
      %16 = sbr.rel target = $region3
    $region8: #{tpu_custom_call.1} parent=1 // loop_exit
      _
    %589 = vsyncpa [#allocation3], 1
    %s590 = scalar_lea.sflag [#allocation3], 1
    %591 = vsyncpa %s590, 1
    %592 = vsyncpa [#allocation6], 1
    %s593 = scalar_lea.sflag [#allocation6], 1
    %594 = vsyncpa %s593, 1
    %595 = vsyncpa [#allocation4], 1
    %s596 = scalar_lea.sflag [#allocation4], 1
    %597 = vsyncpa %s596, 1

</llo_original>
